<compile_context>
chip_gen: v6e
topology: v6e:2x2x1
jax: 0.10.0
libtpu: 0.0.40
codegen_flags: <defaults>
</compile_context>

<pallas_src>
import functools

import jax
import jax.numpy as jnp
from jax.experimental import pallas as pl
from jax.experimental.pallas import tpu as pltpu


_PALLAS_MIN_ELEMS = 1 << 16   # below this, plain XLA fusion beats kernel launch cost
_MAX_TB = 512                 # max sublane-dim tile rows
_MAX_TC = 1024                # max lane-dim tile cols (multiple of 128) -> <=2 MiB f32 tile
                              # 2 arrays x 2 buffers x 2 MiB = 8 MiB << 32 MiB scoped VMEM (v7x-safe)


def _bias_kernel(params_ref, x_ref, o_ref, *, low, high, col_block_start):
    """params_ref: SMEM f32[2] = (alpha, beta). x_ref/o_ref: VMEM (TB, TC) tiles."""
    alpha = params_ref[0]
    beta = params_ref[1]

    tc = x_ref.shape[-1]
    # Global column index of this tile's first column.
    col0 = (col_block_start + pl.program_id(1)) * tc

    interior = jnp.logical_and(col0 >= low, col0 + tc <= high)

    @pl.when(interior)
    def _():
        # Tile fully inside [low, high): no mask needed, pure affine.
        xf = x_ref[...].astype(jnp.float32)
        o_ref[...] = (alpha * xf + beta).astype(o_ref.dtype)

    @pl.when(jnp.logical_not(interior))
    def _():
        # Boundary tile: mask with global column indices.
        xf = x_ref[...].astype(jnp.float32)
        col = col0 + jax.lax.broadcasted_iota(jnp.int32, xf.shape, dimension=1)
        in_range = jnp.logical_and(col >= low, col < high)
        o_ref[...] = jnp.where(in_range, alpha * xf + beta, xf).astype(o_ref.dtype)


def _pick_block(dim, align, max_blk):
    """Largest block <= max_blk that is either the full dim or a multiple of align."""
    if dim <= max_blk:
        return dim
    return max((max_blk // align) * align, align)


def bias_layer_forward(x, alpha, beta, low_range, high_range, use_pallas=None):
    """x: [B, C]. alpha/beta: scalars (learnable). low/high: Python ints (static slice)."""
    assert x.ndim == 2, "BiasLayer expects [batch, num_classes] logits"
    B, C = x.shape
    low = max(int(low_range), 0)
    high = min(int(high_range), C)
    if high <= low:                       # empty slice -> pure clone
        return x

    if use_pallas is None:
        use_pallas = x.size >= _PALLAS_MIN_ELEMS
    if not use_pallas:
        # Tiny inputs: a pallas_call is pure launch overhead; let XLA fuse this.
        col = jnp.arange(C, dtype=jnp.int32)[None, :]
        mask = (col >= low) & (col < high)
        y = jnp.float32(alpha) * x.astype(jnp.float32) + jnp.float32(beta)
        return jnp.where(mask, y, x.astype(jnp.float32)).astype(x.dtype)

    # Keep the learnable scalars in f32 SMEM regardless of x dtype.
    params = jnp.asarray([alpha, beta], dtype=jnp.float32)

    itemsize = jnp.dtype(x.dtype).itemsize
    sub_align = {4: 8, 2: 16, 1: 32}.get(itemsize, 8)
    TB = _pick_block(B, sub_align, _MAX_TB)
    TC = _pick_block(C, 128, _MAX_TC)

    # Restrict the column grid to only the tiles overlapping [low, high).
    c0 = low // TC
    c1 = pl.cdiv(high, TC)
    grid = (pl.cdiv(B, TB), c1 - c0)

    kernel = functools.partial(
        _bias_kernel, low=low, high=high, col_block_start=c0)

    return pl.pallas_call(
        kernel,
        out_shape=jax.ShapeDtypeStruct(x.shape, x.dtype),
        grid=grid,
        in_specs=[
            pl.BlockSpec(memory_space=pltpu.SMEM),               # (alpha, beta)
            pl.BlockSpec((TB, TC), lambda i, j: (i, c0 + j)),    # x tiles in range
        ],
        out_specs=pl.BlockSpec((TB, TC), lambda i, j: (i, c0 + j)),
        # Output aliases x: column tiles outside [low, high) are never touched
        # and keep their input values -> implements `clone` with zero traffic.
        input_output_aliases={1: 0},
        compiler_params=pltpu.CompilerParams(
            dimension_semantics=("parallel", "arbitrary"),
            vmem_limit_bytes=32 * 1024 * 1024,
        ),
    )(params, x)


def _reference(x, alpha, beta, low, high):
    col = jnp.arange(x.shape[1], dtype=jnp.int32)[None, :]
    mask = (col >= low) & (col < high)
    y = jnp.float32(alpha) * x.astype(jnp.float32) + jnp.float32(beta)
    return jnp.where(mask, y, x.astype(jnp.float32)).astype(x.dtype)


if __name__ == "__main__":
    key = jax.random.PRNGKey(0)
    k1, k2 = jax.random.split(key)

    # --- Small shape implied by the module (logits: batch=2, classes=16). ---
    B, C = 2, 16
    x_small = jax.random.normal(k1, (B, C), dtype=jnp.float32)
    low, high = 4, 12

    # Default init (alpha=1, beta=0); force the Pallas path even though tiny.
    ref0 = _reference(x_small, 1.0, 0.0, low, high)
    out0 = jax.block_until_ready(
        bias_layer_forward(x_small, 1.0, 0.0, low, high, use_pallas=True))
    assert jnp.allclose(out0, ref0, atol=1e-6), "mismatch (identity params)"

    # Non-trivial alpha/beta.
    ref1 = _reference(x_small, 2.5, -0.75, low, high)
    out1 = jax.block_until_ready(
        bias_layer_forward(x_small, 2.5, -0.75, low, high, use_pallas=True))
    assert jnp.allclose(out1, ref1, atol=1e-6), "mismatch (affine params)"

    # --- Larger shape: exercises tiling, boundary masking, restricted grid. ---
    B2, C2 = 64, 2048
    x_big = jax.random.normal(k2, (B2, C2), dtype=jnp.float32)

    # Range spanning both column tiles (non-aligned boundaries -> masked edges).
    ref2 = _reference(x_big, 0.5, 3.0, 700, 1500)
    out2 = jax.block_until_ready(bias_layer_forward(x_big, 0.5, 3.0, 700, 1500))
    assert jnp.allclose(out2, ref2, atol=1e-5), "mismatch (two-tile range)"

    # Range inside the second column tile only: the first tile is never DMA'd
    # and is preserved purely through the input/output alias.
    ref3 = _reference(x_big, -1.25, 0.125, 1100, 1900)
    out3 = jax.block_until_ready(bias_layer_forward(x_big, -1.25, 0.125, 1100, 1900))
    assert jnp.allclose(out3, ref3, atol=1e-5), "mismatch (aliased untouched tile)"

    print("KERNEL_OK")
</pallas_src>

<mosaic_0001>
module attributes {stable_mosaic.version = 11 : i64} {
  func.func @_bias_kernel(%arg0: i32, %arg1: i32, %arg2: memref<2xf32, #tpu.memory_space<smem>>, %arg3: memref<2x16xf32, #tpu.memory_space<vmem>>, %arg4: memref<2x16xf32, #tpu.memory_space<vmem>>) attributes {dimension_semantics = [#tpu.dimension_semantics<parallel>, #tpu.dimension_semantics<arbitrary>], iteration_bounds = array<i64: 1, 1>, scalar_prefetch = 0 : i64, scratch_operands = 0 : i64, tpu.core_type = #tpu.core_type<tc>, window_params = [{transform_indices = @transform_0, window_bounds = array<i64: 2>}, {transform_indices = @transform_1, window_bounds = array<i64: 2, 16>}, {transform_indices = @transform_2, window_bounds = array<i64: 2, 16>}]} {
    %c0 = arith.constant 0 : index
    %0 = memref.load %arg2[%c0] : memref<2xf32, #tpu.memory_space<smem>>
    %c1 = arith.constant 1 : index
    %1 = memref.load %arg2[%c1] : memref<2xf32, #tpu.memory_space<smem>>
    %c0_i32 = arith.constant 0 : i32
    %2 = arith.addi %c0_i32, %arg1 : i32
    %c16_i32 = arith.constant 16 : i32
    %3 = arith.muli %2, %c16_i32 : i32
    %c4_i32 = arith.constant 4 : i32
    %4 = arith.cmpi sge, %3, %c4_i32 : i32
    %c16_i32_0 = arith.constant 16 : i32
    %5 = arith.addi %3, %c16_i32_0 : i32
    %c12_i32 = arith.constant 12 : i32
    %6 = arith.cmpi sle, %5, %c12_i32 : i32
    %7 = arith.andi %4, %6 : i1
    %8 = arith.extui %7 : i1 to i32
    %c0_i32_1 = arith.constant 0 : i32
    %9 = arith.cmpi ne, %8, %c0_i32_1 : i32
    scf.if %9 {
      %c0_3 = arith.constant 0 : index
      %c0_4 = arith.constant 0 : index
      %13 = vector.load %arg3[%c0_3, %c0_4] : memref<2x16xf32, #tpu.memory_space<vmem>>, vector<2x16xf32>
      %14 = vector.broadcast %0 : f32 to vector<2x16xf32>
      %15 = arith.mulf %14, %13 : vector<2x16xf32>
      %16 = vector.broadcast %1 : f32 to vector<2x16xf32>
      %17 = arith.addf %15, %16 : vector<2x16xf32>
      %c0_5 = arith.constant 0 : index
      %c0_6 = arith.constant 0 : index
      %18 = vector.load %arg4[%c0_5, %c0_6] : memref<2x16xf32, #tpu.memory_space<vmem>>, vector<2x16xf32>
      tpu.vector_store %arg4[%c0_5, %c0_6], %17 {strides = array<i32>} : memref<2x16xf32, #tpu.memory_space<vmem>>, vector<2x16xf32>,
    } else {
    }
    %true = arith.constant true
    %10 = arith.xori %7, %true : i1
    %11 = arith.extui %10 : i1 to i32
    %c0_i32_2 = arith.constant 0 : i32
    %12 = arith.cmpi ne, %11, %c0_i32_2 : i32
    scf.if %12 {
      %c0_3 = arith.constant 0 : index
      %c0_4 = arith.constant 0 : index
      %13 = vector.load %arg3[%c0_3, %c0_4] : memref<2x16xf32, #tpu.memory_space<vmem>>, vector<2x16xf32>
      %14 = tpu.iota {dimensions = array<i32: 1>} : vector<2x16xi32>
      %15 = vector.broadcast %3 : i32 to vector<2x16xi32>
      %16 = arith.addi %15, %14 : vector<2x16xi32>
      %c4_i32_5 = arith.constant 4 : i32
      %17 = vector.broadcast %c4_i32_5 : i32 to vector<2x16xi32>
      %18 = arith.cmpi sge, %16, %17 : vector<2x16xi32>
      %c12_i32_6 = arith.constant 12 : i32
      %19 = vector.broadcast %c12_i32_6 : i32 to vector<2x16xi32>
      %20 = arith.cmpi slt, %16, %19 : vector<2x16xi32>
      %21 = arith.andi %18, %20 : vector<2x16xi1>
      %22 = vector.broadcast %0 : f32 to vector<2x16xf32>
      %23 = arith.mulf %22, %13 : vector<2x16xf32>
      %24 = vector.broadcast %1 : f32 to vector<2x16xf32>
      %25 = arith.addf %23, %24 : vector<2x16xf32>
      %26 = arith.select %21, %25, %13 : vector<2x16xi1>, vector<2x16xf32>
      %c0_7 = arith.constant 0 : index
      %c0_8 = arith.constant 0 : index
      %27 = vector.load %arg4[%c0_7, %c0_8] : memref<2x16xf32, #tpu.memory_space<vmem>>, vector<2x16xf32>
      tpu.vector_store %arg4[%c0_7, %c0_8], %26 {strides = array<i32>} : memref<2x16xf32, #tpu.memory_space<vmem>>, vector<2x16xf32>,
    } else {
    }
    return
  }
  func.func @transform_0(%arg0: i32, %arg1: i32) -> i32 {
    %c0_i32 = arith.constant 0 : i32
    %c0_i32_0 = arith.constant 0 : i32
    return %c0_i32 : i32
  }
  func.func @transform_1(%arg0: i32, %arg1: i32) -> (i32, i32) {
    %c0_i32 = arith.constant 0 : i32
    %0 = arith.addi %c0_i32, %arg1 : i32
    %c0_i32_0 = arith.constant 0 : i32
    return %arg0, %0 : i32, i32
  }
  func.func @transform_2(%arg0: i32, %arg1: i32) -> (i32, i32) {
    %c0_i32 = arith.constant 0 : i32
    %0 = arith.addi %c0_i32, %arg1 : i32
    %c0_i32_0 = arith.constant 0 : i32
    return %arg0, %0 : i32, i32
  }
}

</mosaic_0001>

<llo_original>
// kernel: tpu_custom_call.1
$region0: #{tpu_custom_call.1}
  #allocation0 [shape = 'u32[]', space=smem, size = 0x4, offset = 0x4, fixed_abs, tag = 'smem constant byte address 0x4 - core index']
  #allocation1 [shape = 'u32[144,128]{1,0:T(1,128)}', space=vmem, size = 0x12000, scoped, tag = 'internal scratch']
  %s0 = inlined_call_operand.vmem [shape: f32[2], index: 0, kind: input, shape index: {}]
  %s1 = inlined_call_operand.hbm [shape: f32[2,16], index: 1, kind: input, shape index: {}, may-alias: {1,2}]
  %s2 = inlined_call_operand.hbm [shape: f32[2,16], index: 2, kind: output, shape index: {}, may-alias: {1,2}]
  %s3 = sld [smem:[#allocation0]]
  $region34: #{tpu_custom_call.1} parent=0
    _
  %s5 = ssub.s32 1, %s3
  %s6 = scalar_select 0, %s5, %s3
  $region1: #{tpu_custom_call.1} parent=0
    #allocation2 [shape = 'u8[512]{0}', space=smem, size = 0x200, scoped, tag = 'input window, operand 0, single buffered']
    #allocation3 [shape = 's32[1]{0}', space=sflag, size = 0x4, scoped, tag = 'scoped memory for tpu_custom_call.1']
    #allocation4 [shape = 's32[1]{0}', space=sflag, size = 0x4, scoped, tag = 'scoped memory for tpu_custom_call.1']
    #allocation5 [shape = 's32[1]{0}', space=sflag, size = 0x4, scoped, tag = 'scoped memory for tpu_custom_call.1']
    #allocation6 [shape = 'u8[1024]{0}', space=vmem, size = 0x400, scoped, tag = 'input window, operand 1, single buffered']
    #allocation7 [shape = 'u8[1024]{0}', space=vmem, size = 0x400, scoped, tag = 'output window, operand 0, single buffered']
    %7 = vsyncpa [#allocation5], 0
    %8 = vsyncpa [#allocation3], 0
    %9 = vsyncpa [#allocation4], 0
    // Predicated region
    $region2: #{tpu_custom_call.1} parent=1 // pred_check
      _
    $region3: #{tpu_custom_call.1} parent=1 // pred_check_branch
      %11 = sbr.rel (0) target = $region5
    $region4: #{tpu_custom_call.1} parent=1 // pred_region
      %s13 = ssub.s32 16, 16
      %14 = vsyncadd [#allocation5], %s13
      %s16 = sshll.u32 %s0, 4
      %s17 = int_to_ptr.vmem [resolvable:$true] %s16
      %19 = dma.vmem_to_smem %s17, 16, [#allocation2], [#allocation5]
    $region5: #{tpu_custom_call.1} parent=1 // pred_fallthru
      _
    // Predicated region
    $region6: #{tpu_custom_call.1} parent=1 // pred_check
      _
    $region7: #{tpu_custom_call.1} parent=1 // pred_check_branch
      %21 = sbr.rel (0) target = $region9
    $region8: #{tpu_custom_call.1} parent=1 // pred_region
      %s23 = ssub.s32 32, 32
      %24 = vsyncadd [#allocation3], %s23
      %s26 = sshll.u32 [#allocation6], 4
      %s27 = int_to_ptr.vmem [resolvable:$true] %s26
      %29 = dma.hbm_to_vmem [thread:$0]  %s1, 32, %s27, [#allocation3]
    $region9: #{tpu_custom_call.1} parent=1 // pred_fallthru
      _
    // Predicated region
    $region10: #{tpu_custom_call.1} parent=1 // pred_check
      _
    $region11: #{tpu_custom_call.1} parent=1 // pred_check_branch
      %31 = sbr.rel (0) target = $region13
    $region12: #{tpu_custom_call.1} parent=1 // pred_region
      %32 = dma.done [#allocation5], 16
    $region13: #{tpu_custom_call.1} parent=1 // pred_fallthru
      _
    // Predicated region
    $region14: #{tpu_custom_call.1} parent=1 // pred_check
      _
    $region15: #{tpu_custom_call.1} parent=1 // pred_check_branch
      %34 = sbr.rel (0) target = $region17
    $region16: #{tpu_custom_call.1} parent=1 // pred_region
      %35 = dma.done [#allocation3], 32
    $region17: #{tpu_custom_call.1} parent=1 // pred_fallthru
      _
    %36 = sfence
    %s37 = sld [smem:[#allocation2]]
    %s38 = sld [smem:[#allocation2 + $0x1]]
    %s39 = smul.u32 0, 16
    %p40 = scmp.ge.s32.totalorder %s39, 4
    %s41 = sadd.s32 %s39, 16
    %p42 = scmp.le.s32.totalorder %s41, 12
    %p43 = pnand %p40, %p42
    %p44 = pneg %p43
    // Predicated region
    $region18: #{tpu_custom_call.1} parent=1 // pred_check
      _
    $region19: #{tpu_custom_call.1} parent=1 // pred_check_branch
      %46 = sbr.rel (%p43) target = $region21
    $region20: #{tpu_custom_call.1} parent=1 // pred_region
      %v47 = vld [vmem:[#allocation6] sm:$0x3]
      %v48 = vstv %s37
      %v49 = vmul.f32 %v48, %v47
      %v50 = vstv %s38
      %v51 = vadd.f32 %v49, %v50
      %vm52 = vcmask 123904
      %53 = vst.msk [vmem:[#allocation7] sm:$0x3] %vm52, %v51
    $region21: #{tpu_custom_call.1} parent=1 // pred_fallthru
      _
    %p54 = pneg %p44
    // Predicated region
    $region22: #{tpu_custom_call.1} parent=1 // pred_check
      _
    $region23: #{tpu_custom_call.1} parent=1 // pred_check_branch
      %56 = sbr.rel (%p44) target = $region25
    $region24: #{tpu_custom_call.1} parent=1 // pred_region
      %v57 = vld [vmem:[#allocation6] sm:$0x3]
      %v58 = vlaneseq
      %v59 = vand.u32 %v58, 127
      %v60 = vstv %s39
      %v61 = vadd.s32 %v60, %v59
      %vm62 = vcmp.ge.s32.totalorder %v61, 4
      %vm63 = vcmp.lt.s32.totalorder %v61, 12
      %vm64 = vmand %vm62, %vm63
      %v65 = vstv %s37
      %v66 = vmul.f32 %v65, %v57
      %v67 = vstv %s38
      %v68 = vadd.f32 %v66, %v67
      %v69 = vsel %vm64, %v68, %v57
      %vm70 = vcmask 123904
      %71 = vst.msk [vmem:[#allocation7] sm:$0x3] %vm70, %v69
    $region25: #{tpu_custom_call.1} parent=1 // pred_fallthru
      _
    // Predicated region
    $region26: #{tpu_custom_call.1} parent=1 // pred_check
      _
    $region27: #{tpu_custom_call.1} parent=1 // pred_check_branch
      %73 = sbr.rel (0) target = $region29
    $region28: #{tpu_custom_call.1} parent=1 // pred_region
      %s75 = ssub.s32 32, 32
      %76 = vsyncadd [#allocation4], %s75
      %s78 = sshll.u32 [#allocation7], 4
      %s79 = int_to_ptr.vmem [resolvable:$true] %s78
      %81 = dma.vmem_to_hbm [thread:$0]  %s79, 32, %s2, [#allocation4]
    $region29: #{tpu_custom_call.1} parent=1 // pred_fallthru
      _
    // Predicated region
    $region30: #{tpu_custom_call.1} parent=1 // pred_check
      _
    $region31: #{tpu_custom_call.1} parent=1 // pred_check_branch
      %83 = sbr.rel (0) target = $region33
    $region32: #{tpu_custom_call.1} parent=1 // pred_region
      %84 = dma.done [#allocation4], 32
    $region33: #{tpu_custom_call.1} parent=1 // pred_fallthru
      _
    %85 = vsyncpa [#allocation3], 1
    %86 = vsyncpa [#allocation4], 1
    %87 = vsyncpa [#allocation5], 1

</llo_original>
